<compile_context>
chip_gen: v7x
topology: tpu7x:2x2x1
jax: 0.10.0
libtpu: 0.0.40
codegen_flags: <defaults>
</compile_context>

<pallas_src>
import math
import numbers

import jax
import jax.numpy as jnp
import numpy as np
from jax.experimental import pallas as pl
from jax.experimental.pallas import tpu as pltpu


def _nearest_kernel(x_ref, m_ref, o_ref):
    # x_ref: (bp, W)   m_ref: (W, Kout)   o_ref: (bp, Kout)
    # 0/1 selection matmul on the MXU -> exact nearest-neighbor replication.
    o_ref[...] = jnp.dot(
        x_ref[...],
        m_ref[...],
        precision=jax.lax.Precision.HIGHEST,
        preferred_element_type=jnp.float32,
    ).astype(o_ref.dtype)


def upsample_nearest(x: jax.Array, out_hw) -> jax.Array:
    """Nearest-neighbor upsample of an NCHW tensor to spatial size (Hout, Wout)."""
    N, C, H, W = x.shape
    Hout, Wout = int(out_hw[0]), int(out_hw[1])

    # PyTorch 'nearest': src = floor(dst * in_size / out_size).
    src_w = (np.arange(Wout) * W) // Wout                      # (Wout,)

    if Hout % H != 0:
        # TODO(synk): fractional/odd H scaling has no fused single-matmul layout;
        # plain-JAX nearest gather fallback for this rare configuration.
        src_h = (np.arange(Hout) * H) // Hout
        return x[:, :, src_h, :][:, :, :, src_w]

    k = Hout // H                  # per-input-row replication factor
    Kout = k * Wout                # fused (row-replication x output-width) pattern
    P = N * C * H                  # total input rows
    ds = x.dtype.itemsize

    # Constant 0/1 selection matrix: M[w, r*Wout + wo] = (src_w[wo] == w).
    src_cols = np.tile(src_w, k)                               # (Kout,)
    M = jnp.asarray(src_cols[None, :] == np.arange(W)[:, None], dtype=x.dtype)

    x2 = x.reshape(P, W)           # trivial row-major reshape (view, no copy)

    # ---- block-row selection (perf feedback: big, lane-dense blocks) ---------
    sublane = {4: 8, 2: 16, 1: 32}.get(ds, 8)                  # dtype sublane packing
    vmem_budget = 12 * 1024 * 1024                             # double-buffered working set
    bp = (vmem_budget // (2 * ds) - W * Kout) // (W + Kout)    # rows per block
    bp = max(sublane, (bp // sublane) * sublane)
    bp = min(bp, 8192)
    if bp >= P:
        bp = P                     # single full-dim block (always a legal block shape)
    grid = (pl.cdiv(P, bp),)       # partial last block handled by Pallas, no padding

    cost = pl.CostEstimate(
        flops=2 * P * W * Kout,
        transcendentals=0,
        bytes_accessed=ds * (P * W + W * Kout + P * Kout),
    )

    out2 = pl.pallas_call(
        _nearest_kernel,
        out_shape=jax.ShapeDtypeStruct((P, Kout), x.dtype),
        grid_spec=pltpu.PrefetchScalarGridSpec(
            num_scalar_prefetch=0,
            grid=grid,
            in_specs=[
                pl.BlockSpec((bp, W), lambda i: (i, 0)),       # input row block
                pl.BlockSpec((W, Kout), lambda i: (0, 0)),     # constant selection matrix
            ],
            out_specs=pl.BlockSpec((bp, Kout), lambda i: (i, 0)),
        ),
        compiler_params=pltpu.CompilerParams(
            dimension_semantics=("parallel",),                 # megacore / v7x 2-TC split
        ),
        cost_estimate=cost,
    )(x2, M)

    # Trivial row-major reshape back to NCHW output (view, no copy).
    return out2.reshape(N, C, Hout, Wout)


class Upsample:
    """Mirrors mobile_cv fbnet_v2 basic_blocks.Upsample (forward = F.interpolate)."""

    def __init__(self, size=None, scale_factor=None, mode="nearest", align_corners=None):
        self.size = size
        self.scale = scale_factor
        self.mode = mode
        self.align_corners = align_corners  # ignored for 'nearest' (matches PyTorch)

    def __call__(self, x):
        if self.mode != "nearest":
            # TODO(synk): linear/bilinear/bicubic modes are not implemented in Pallas here.
            raise NotImplementedError("Only mode='nearest' is implemented")
        N, C, H, W = x.shape
        if self.size is not None:
            s = self.size
            if isinstance(s, numbers.Number):
                Hout, Wout = int(s), int(s)
            else:
                Hout, Wout = int(s[0]), int(s[1])
        elif self.scale is not None:
            sc = self.scale
            if isinstance(sc, numbers.Number):
                sh, sw = sc, sc
            else:
                sh, sw = sc[0], sc[1]
            Hout, Wout = int(math.floor(H * sh)), int(math.floor(W * sw))
        else:
            raise ValueError("either size or scale_factor must be given")
        return upsample_nearest(x, (Hout, Wout))


if __name__ == "__main__":
    key = jax.random.PRNGKey(0)
    x = jax.random.normal(key, (2, 4, 16, 16), dtype=jnp.float32)  # NCHW

    up = Upsample(scale_factor=2, mode="nearest")
    out = up(x)
    jax.block_until_ready(out)

    # Reference: 2x nearest upsample == element repeat along H and W.
    ref = jnp.repeat(jnp.repeat(x, 2, axis=2), 2, axis=3)
    assert out.shape == (2, 4, 32, 32), out.shape
    assert jnp.allclose(out, ref, atol=1e-6, rtol=1e-6)

    print("KERNEL_OK")
</pallas_src>

<mosaic_0001>
module attributes {stable_mosaic.version = 11 : i64} {
  func.func @_nearest_kernel(%arg0: i32, %arg1: memref<128x16xf32, #tpu.memory_space<vmem>>, %arg2: memref<16x64xf32, #tpu.memory_space<vmem>>, %arg3: memref<128x64xf32, #tpu.memory_space<vmem>>) attributes {dimension_semantics = [#tpu.dimension_semantics<parallel>], iteration_bounds = array<i64: 1>, scalar_prefetch = 0 : i64, scratch_operands = 0 : i64, tpu.core_type = #tpu.core_type<tc>, window_params = [{transform_indices = @transform_0, window_bounds = array<i64: 128, 16>}, {pipeline_mode = #tpu.pipeline_mode<synchronous>, transform_indices = @transform_1, window_bounds = array<i64: 16, 64>}, {transform_indices = @transform_2, window_bounds = array<i64: 128, 64>}]} {
    %c0 = arith.constant 0 : index
    %c0_0 = arith.constant 0 : index
    %0 = vector.load %arg1[%c0, %c0_0] : memref<128x16xf32, #tpu.memory_space<vmem>>, vector<128x16xf32>
    %c0_1 = arith.constant 0 : index
    %c0_2 = arith.constant 0 : index
    %1 = vector.load %arg2[%c0_1, %c0_2] : memref<16x64xf32, #tpu.memory_space<vmem>>, vector<16x64xf32>
    %cst = arith.constant dense<0.000000e+00> : vector<128x64xf32>
    %2 = tpu.matmul %0, %1, %cst {dimension_numbers = #tpu.dot_dimension_numbers<[1], [0], [0], [1], [0, 0, 1, 1], [], []>, precision = #tpu.contract_precision<fp32>} : vector<128x16xf32>, vector<16x64xf32>, vector<128x64xf32> -> vector<128x64xf32>
    %c0_3 = arith.constant 0 : index
    %c0_4 = arith.constant 0 : index
    %3 = vector.load %arg3[%c0_3, %c0_4] : memref<128x64xf32, #tpu.memory_space<vmem>>, vector<128x64xf32>
    tpu.vector_store %arg3[%c0_3, %c0_4], %2 {strides = array<i32>} : memref<128x64xf32, #tpu.memory_space<vmem>>, vector<128x64xf32>,
    return
  }
  func.func @transform_0(%arg0: i32) -> (i32, i32) {
    %c0_i32 = arith.constant 0 : i32
    %c0_i32_0 = arith.constant 0 : i32
    return %arg0, %c0_i32 : i32, i32
  }
  func.func @transform_1(%arg0: i32) -> (i32, i32) {
    %c0_i32 = arith.constant 0 : i32
    %c0_i32_0 = arith.constant 0 : i32
    %c0_i32_1 = arith.constant 0 : i32
    return %c0_i32, %c0_i32_0 : i32, i32
  }
  func.func @transform_2(%arg0: i32) -> (i32, i32) {
    %c0_i32 = arith.constant 0 : i32
    %c0_i32_0 = arith.constant 0 : i32
    return %arg0, %c0_i32 : i32, i32
  }
}

</mosaic_0001>

<llo_original>
// kernel: tpu_custom_call.1
$region0: #{tpu_custom_call.1}
  #allocation0 [shape = 'u32[]', space=smem, size = 0x4, offset = 0x4, fixed_abs, tag = 'smem constant byte address 0x4 - core index']
  #allocation1 [shape = 'u32[144,128]{1,0:T(1,128)}', space=vmem, size = 0x12000, scoped, tag = 'internal scratch']
  %s0 = inlined_call_operand.vmem [shape: f32[128,16], index: 0, kind: input, shape index: {}]
  %s1 = inlined_call_operand.vmem [shape: f32[16,64], index: 1, kind: input, shape index: {}]
  %s2 = inlined_call_operand.vmem [shape: f32[128,64], index: 2, kind: output, shape index: {}]
  %s3 = sld [smem:[#allocation0]]
  $region18: #{tpu_custom_call.1} parent=0
    _
  %s5 = ssub.s32 1, %s3
  %s6 = scalar_select 0, %s5, %s3
  // Predicated region
  $region2: #{tpu_custom_call.1} parent=0 // pred_check
    _
  $region3: #{tpu_custom_call.1} parent=0 // pred_check_branch
    %8 = sbr.rel (0) target = $region5
  $region4: #{tpu_custom_call.1} parent=0 // pred_region
    _
  $region5: #{tpu_custom_call.1} parent=0 // pred_fallthru
    _
  // Predicated region
  $region6: #{tpu_custom_call.1} parent=0 // pred_check
    _
  $region7: #{tpu_custom_call.1} parent=0 // pred_check_branch
    %10 = sbr.rel (0) target = $region9
  $region8: #{tpu_custom_call.1} parent=0 // pred_region
    _
  $region9: #{tpu_custom_call.1} parent=0 // pred_fallthru
    _
  %v11 = vld [vmem:[%s0] sm:$0xff]
  %v12 = vld [vmem:[%s0 + $0x8] sm:$0xff]
  %v13 = vld [vmem:[%s0 + $0x10] sm:$0xff]
  %v14 = vld [vmem:[%s0 + $0x18] sm:$0xff]
  %v15 = vld [vmem:[%s0 + $0x20] sm:$0xff]
  %v16 = vld [vmem:[%s0 + $0x28] sm:$0xff]
  %v17 = vld [vmem:[%s0 + $0x30] sm:$0xff]
  %v18 = vld [vmem:[%s0 + $0x38] sm:$0xff]
  %v19 = vld [vmem:[%s0 + $0x40] sm:$0xff]
  %v20 = vld [vmem:[%s0 + $0x48] sm:$0xff]
  %v21 = vld [vmem:[%s0 + $0x50] sm:$0xff]
  %v22 = vld [vmem:[%s0 + $0x58] sm:$0xff]
  %v23 = vld [vmem:[%s0 + $0x60] sm:$0xff]
  %v24 = vld [vmem:[%s0 + $0x68] sm:$0xff]
  %v25 = vld [vmem:[%s0 + $0x70] sm:$0xff]
  %v26 = vld [vmem:[%s0 + $0x78] sm:$0xff]
  %v27 = vld [vmem:[%s1] sm:$0xff]
  %v28 = vld [vmem:[%s1 + $0x8] sm:$0xff]
  %vm29 = vcmask 130048
  %v31 = vsel %vm29, %v11, 0
  %v34 = vsel %vm29, %v12, 0
  %v37 = vsel %vm29, %v13, 0
  %v40 = vsel %vm29, %v14, 0
  %v43 = vsel %vm29, %v15, 0
  %v46 = vsel %vm29, %v16, 0
  %v49 = vsel %vm29, %v17, 0
  %v52 = vsel %vm29, %v18, 0
  %v55 = vsel %vm29, %v19, 0
  %v58 = vsel %vm29, %v20, 0
  %v61 = vsel %vm29, %v21, 0
  %v64 = vsel %vm29, %v22, 0
  %v67 = vsel %vm29, %v23, 0
  %v70 = vsel %vm29, %v24, 0
  %v73 = vsel %vm29, %v25, 0
  %v76 = vsel %vm29, %v26, 0
  %78 = vmatprep.subr.mxu0 0.0
  %v79 = vand.u32 %v27, 4294901760
  %80 = vmatpush1.msra.mxu0 %v79
  %81 = vmatprep.subr.mxu0 0.0
  %v82 = vand.u32 %v28, 4294901760
  %83 = vmatpush1.msra.mxu0 %v82
  %84 = vmatprep.subr.mxu0 0.0
  %85 = vmatpush1.msra.mxu0 0.0
  %86 = vmatprep.subr.mxu0 0.0
  %87 = vmatpush1.msra.mxu0 0.0
  %88 = vmatprep.subr.mxu0 0.0
  %89 = vmatpush1.msra.mxu0 0.0
  %90 = vmatprep.subr.mxu0 0.0
  %91 = vmatpush1.msra.mxu0 0.0
  %92 = vmatprep.subr.mxu0 0.0
  %93 = vmatpush1.msra.mxu0 0.0
  %94 = vmatprep.subr.mxu0 0.0
  %95 = vmatpush1.msra.mxu0 0.0
  %96 = vmatprep.subr.mxu0 0.0
  %97 = vmatpush1.msra.mxu0 0.0
  %98 = vmatprep.subr.mxu0 0.0
  %99 = vmatpush1.msra.mxu0 0.0
  %100 = vmatprep.subr.mxu0 0.0
  %101 = vmatpush1.msra.mxu0 0.0
  %102 = vmatprep.subr.mxu0 0.0
  %103 = vmatpush1.msra.mxu0 0.0
  %104 = vmatprep.subr.mxu0 0.0
  %105 = vmatpush1.msra.mxu0 0.0
  %106 = vmatprep.subr.mxu0 0.0
  %107 = vmatpush1.msra.mxu0 0.0
  %108 = vmatprep.subr.mxu0 0.0
  %109 = vmatpush1.msra.mxu0 0.0
  %110 = vmatprep.subr.mxu0 0.0
  %111 = vmatpush1.msra.mxu0 0.0
  %112 = vmatprep.subr.mxu0 0.0
  %113 = vmatpush1.msra.mxu0 0.0
  %114 = vmatprep.subr.mxu0 0.0
  %115 = vmatpush1.msra.mxu0 0.0
  %116 = vmatprep.subr.mxu0 0.0
  %117 = vmatpush1.msra.mxu0 0.0
  %118 = vmatprep.subr.mxu0 0.0
  %119 = vmatpush1.msra.mxu0 0.0
  %120 = vmatprep.subr.mxu0 0.0
  %121 = vmatpush1.msra.mxu0 0.0
  %122 = vmatprep.subr.mxu0 0.0
  %123 = vmatpush1.msra.mxu0 0.0
  %124 = vmatprep.subr.mxu0 0.0
  %125 = vmatpush1.msra.mxu0 0.0
  %126 = vmatprep.subr.mxu0 0.0
  %127 = vmatpush1.msra.mxu0 0.0
  %128 = vmatprep.subr.mxu0 0.0
  %129 = vmatpush1.msra.mxu0 0.0
  %130 = vmatprep.subr.mxu0 0.0
  %131 = vmatpush1.msra.mxu0 0.0
  %132 = vmatprep.subr.mxu0 0.0
  %133 = vmatpush1.msra.mxu0 0.0
  %134 = vmatprep.subr.mxu0 0.0
  %135 = vmatpush1.msra.mxu0 0.0
  %136 = vmatprep.subr.mxu0 0.0
  %137 = vmatpush1.msra.mxu0 0.0
  %138 = vmatprep.subr.mxu0 0.0
  %139 = vmatpush1.msra.mxu0 0.0
  %140 = vmatprep.subr.mxu0 0.0
  %141 = vmatpush1.msra.mxu0 0.0
  %142 = vmatprep.subr.mxu0 0.0
  %143 = vmatpush1.msra.mxu0 0.0
  %144 = vmatprep.mubr.f32.mxu0 0.0
  %v145 = vand.u32 %v31, 4294901760
  %v146 = vsub.f32 %v31, %v145
  %v147 = vand.u32 %v146, 4294901760
  %v148 = vsub.f32 %v146, %v147
  %v149 = vand.u32 %v148, 4294901760
  %150 = vmatmul.mubr.f32.gmra.mrb[0].mxu0 %v149
  %v151 = vpop.f32.mrb[0].mxu0
  %v152 = vadd.f32 0.0, %v151
  %v153 = vpop.f32.mrb[0].mxu0
  %154 = vmatprep.mubr.f32.mxu0 0.0
  %v155 = vand.u32 %v34, 4294901760
  %v156 = vsub.f32 %v34, %v155
  %v157 = vand.u32 %v156, 4294901760
  %v158 = vsub.f32 %v156, %v157
  %v159 = vand.u32 %v158, 4294901760
  %160 = vmatmul.mubr.f32.gmra.mrb[0].mxu0 %v159
  %v161 = vpop.f32.mrb[0].mxu0
  %v162 = vadd.f32 0.0, %v161
  %v163 = vpop.f32.mrb[0].mxu0
  %164 = vmatprep.mubr.f32.mxu0 0.0
  %v165 = vand.u32 %v37, 4294901760
  %v166 = vsub.f32 %v37, %v165
  %v167 = vand.u32 %v166, 4294901760
  %v168 = vsub.f32 %v166, %v167
  %v169 = vand.u32 %v168, 4294901760
  %170 = vmatmul.mubr.f32.gmra.mrb[0].mxu0 %v169
  %v171 = vpop.f32.mrb[0].mxu0
  %v172 = vadd.f32 0.0, %v171
  %v173 = vpop.f32.mrb[0].mxu0
  %174 = vmatprep.mubr.f32.mxu0 0.0
  %v175 = vand.u32 %v40, 4294901760
  %v176 = vsub.f32 %v40, %v175
  %v177 = vand.u32 %v176, 4294901760
  %v178 = vsub.f32 %v176, %v177
  %v179 = vand.u32 %v178, 4294901760
  %180 = vmatmul.mubr.f32.gmra.mrb[0].mxu0 %v179
  %v181 = vpop.f32.mrb[0].mxu0
  %v182 = vadd.f32 0.0, %v181
  %v183 = vpop.f32.mrb[0].mxu0
  %184 = vmatprep.mubr.f32.mxu0 0.0
  %v185 = vand.u32 %v43, 4294901760
  %v186 = vsub.f32 %v43, %v185
  %v187 = vand.u32 %v186, 4294901760
  %v188 = vsub.f32 %v186, %v187
  %v189 = vand.u32 %v188, 4294901760
  %190 = vmatmul.mubr.f32.gmra.mrb[0].mxu0 %v189
  %v191 = vpop.f32.mrb[0].mxu0
  %v192 = vadd.f32 0.0, %v191
  %v193 = vpop.f32.mrb[0].mxu0
  %194 = vmatprep.mubr.f32.mxu0 0.0
  %v195 = vand.u32 %v46, 4294901760
  %v196 = vsub.f32 %v46, %v195
  %v197 = vand.u32 %v196, 4294901760
  %v198 = vsub.f32 %v196, %v197
  %v199 = vand.u32 %v198, 4294901760
  %200 = vmatmul.mubr.f32.gmra.mrb[0].mxu0 %v199
  %v201 = vpop.f32.mrb[0].mxu0
  %v202 = vadd.f32 0.0, %v201
  %v203 = vpop.f32.mrb[0].mxu0
  %204 = vmatprep.mubr.f32.mxu0 0.0
  %v205 = vand.u32 %v49, 4294901760
  %v206 = vsub.f32 %v49, %v205
  %v207 = vand.u32 %v206, 4294901760
  %v208 = vsub.f32 %v206, %v207
  %v209 = vand.u32 %v208, 4294901760
  %210 = vmatmul.mubr.f32.gmra.mrb[0].mxu0 %v209
  %v211 = vpop.f32.mrb[0].mxu0
  %v212 = vadd.f32 0.0, %v211
  %v213 = vpop.f32.mrb[0].mxu0
  %214 = vmatprep.mubr.f32.mxu0 0.0
  %v215 = vand.u32 %v52, 4294901760
  %v216 = vsub.f32 %v52, %v215
  %v217 = vand.u32 %v216, 4294901760
  %v218 = vsub.f32 %v216, %v217
  %v219 = vand.u32 %v218, 4294901760
  %220 = vmatmul.mubr.f32.gmra.mrb[0].mxu0 %v219
  %v221 = vpop.f32.mrb[0].mxu0
  %v222 = vadd.f32 0.0, %v221
  %v223 = vpop.f32.mrb[0].mxu0
  %224 = vmatprep.mubr.f32.mxu0 0.0
  %v225 = vand.u32 %v55, 4294901760
  %v226 = vsub.f32 %v55, %v225
  %v227 = vand.u32 %v226, 4294901760
  %v228 = vsub.f32 %v226, %v227
  %v229 = vand.u32 %v228, 4294901760
  %230 = vmatmul.mubr.f32.gmra.mrb[0].mxu0 %v229
  %v231 = vpop.f32.mrb[0].mxu0
  %v232 = vadd.f32 0.0, %v231
  %v233 = vpop.f32.mrb[0].mxu0
  %234 = vmatprep.mubr.f32.mxu0 0.0
  %v235 = vand.u32 %v58, 4294901760
  %v236 = vsub.f32 %v58, %v235
  %v237 = vand.u32 %v236, 4294901760
  %v238 = vsub.f32 %v236, %v237
  %v239 = vand.u32 %v238, 4294901760
  %240 = vmatmul.mubr.f32.gmra.mrb[0].mxu0 %v239
  %v241 = vpop.f32.mrb[0].mxu0
  %v242 = vadd.f32 0.0, %v241
  %v243 = vpop.f32.mrb[0].mxu0
  %244 = vmatprep.mubr.f32.mxu0 0.0
  %v245 = vand.u32 %v61, 4294901760
  %v246 = vsub.f32 %v61, %v245
  %v247 = vand.u32 %v246, 4294901760
  %v248 = vsub.f32 %v246, %v247
  %v249 = vand.u32 %v248, 4294901760
  %250 = vmatmul.mubr.f32.gmra.mrb[0].mxu0 %v249
  %v251 = vpop.f32.mrb[0].mxu0
  %v252 = vadd.f32 0.0, %v251
  %v253 = vpop.f32.mrb[0].mxu0
  %254 = vmatprep.mubr.f32.mxu0 0.0
  %v255 = vand.u32 %v64, 4294901760
  %v256 = vsub.f32 %v64, %v255
  %v257 = vand.u32 %v256, 4294901760
  %v258 = vsub.f32 %v256, %v257
  %v259 = vand.u32 %v258, 4294901760
  %260 = vmatmul.mubr.f32.gmra.mrb[0].mxu0 %v259
  %v261 = vpop.f32.mrb[0].mxu0
  %v262 = vadd.f32 0.0, %v261
  %v263 = vpop.f32.mrb[0].mxu0
  %264 = vmatprep.mubr.f32.mxu0 0.0
  %v265 = vand.u32 %v67, 4294901760
  %v266 = vsub.f32 %v67, %v265
  %v267 = vand.u32 %v266, 4294901760
  %v268 = vsub.f32 %v266, %v267
  %v269 = vand.u32 %v268, 4294901760
  %270 = vmatmul.mubr.f32.gmra.mrb[0].mxu0 %v269
  %v271 = vpop.f32.mrb[0].mxu0
  %v272 = vadd.f32 0.0, %v271
  %v273 = vpop.f32.mrb[0].mxu0
  %274 = vmatprep.mubr.f32.mxu0 0.0
  %v275 = vand.u32 %v70, 4294901760
  %v276 = vsub.f32 %v70, %v275
  %v277 = vand.u32 %v276, 4294901760
  %v278 = vsub.f32 %v276, %v277
  %v279 = vand.u32 %v278, 4294901760
  %280 = vmatmul.mubr.f32.gmra.mrb[0].mxu0 %v279
  %v281 = vpop.f32.mrb[0].mxu0
  %v282 = vadd.f32 0.0, %v281
  %v283 = vpop.f32.mrb[0].mxu0
  %284 = vmatprep.mubr.f32.mxu0 0.0
  %v285 = vand.u32 %v73, 4294901760
  %v286 = vsub.f32 %v73, %v285
  %v287 = vand.u32 %v286, 4294901760
  %v288 = vsub.f32 %v286, %v287
  %v289 = vand.u32 %v288, 4294901760
  %290 = vmatmul.mubr.f32.gmra.mrb[0].mxu0 %v289
  %v291 = vpop.f32.mrb[0].mxu0
  %v292 = vadd.f32 0.0, %v291
  %v293 = vpop.f32.mrb[0].mxu0
  %294 = vmatprep.mubr.f32.mxu0 0.0
  %v295 = vand.u32 %v76, 4294901760
  %v296 = vsub.f32 %v76, %v295
  %v297 = vand.u32 %v296, 4294901760
  %v298 = vsub.f32 %v296, %v297
  %v299 = vand.u32 %v298, 4294901760
  %300 = vmatmul.mubr.f32.gmra.mrb[0].mxu0 %v299
  %v301 = vpop.f32.mrb[0].mxu0
  %v302 = vadd.f32 0.0, %v301
  %v303 = vpop.f32.mrb[0].mxu0
  %304 = vdwg.mxu0
  %305 = vmatprep.subr.mxu0 0.0
  %v306 = vand.u32 %v27, 4294901760
  %v307 = vsub.f32 %v27, %v306
  %v308 = vand.u32 %v307, 4294901760
  %v309 = vsub.f32 %v307, %v308
  %v310 = vand.u32 %v309, 4294901760
  %311 = vmatpush1.msra.mxu0 %v310
  %312 = vmatprep.subr.mxu0 0.0
  %v313 = vand.u32 %v28, 4294901760
  %v314 = vsub.f32 %v28, %v313
  %v315 = vand.u32 %v314, 4294901760
  %v316 = vsub.f32 %v314, %v315
  %v317 = vand.u32 %v316, 4294901760
  %318 = vmatpush1.msra.mxu0 %v317
  %319 = vmatprep.subr.mxu0 0.0
  %320 = vmatpush1.msra.mxu0 0.0
  %321 = vmatprep.subr.mxu0 0.0
  %322 = vmatpush1.msra.mxu0 0.0
  %323 = vmatprep.subr.mxu0 0.0
  %324 = vmatpush1.msra.mxu0 0.0
  %325 = vmatprep.subr.mxu0 0.0
  %326 = vmatpush1.msra.mxu0 0.0
  %327 = vmatprep.subr.mxu0 0.0
  %328 = vmatpush1.msra.mxu0 0.0
  %329 = vmatprep.subr.mxu0 0.0
  %330 = vmatpush1.msra.mxu0 0.0
  %331 = vmatprep.subr.mxu0 0.0
  %332 = vmatpush1.msra.mxu0 0.0
  %333 = vmatprep.subr.mxu0 0.0
  %334 = vmatpush1.msra.mxu0 0.0
  %335 = vmatprep.subr.mxu0 0.0
  %336 = vmatpush1.msra.mxu0 0.0
  %337 = vmatprep.subr.mxu0 0.0
  %338 = vmatpush1.msra.mxu0 0.0
  %339 = vmatprep.subr.mxu0 0.0
  %340 = vmatpush1.msra.mxu0 0.0
  %341 = vmatprep.subr.mxu0 0.0
  %342 = vmatpush1.msra.mxu0 0.0
  %343 = vmatprep.subr.mxu0 0.0
  %344 = vmatpush1.msra.mxu0 0.0
  %345 = vmatprep.subr.mxu0 0.0
  %346 = vmatpush1.msra.mxu0 0.0
  %347 = vmatprep.subr.mxu0 0.0
  %348 = vmatpush1.msra.mxu0 0.0
  %349 = vmatprep.subr.mxu0 0.0
  %350 = vmatpush1.msra.mxu0 0.0
  %351 = vmatprep.subr.mxu0 0.0
  %352 = vmatpush1.msra.mxu0 0.0
  %353 = vmatprep.subr.mxu0 0.0
  %354 = vmatpush1.msra.mxu0 0.0
  %355 = vmatprep.subr.mxu0 0.0
  %356 = vmatpush1.msra.mxu0 0.0
  %357 = vmatprep.subr.mxu0 0.0
  %358 = vmatpush1.msra.mxu0 0.0
  %359 = vmatprep.subr.mxu0 0.0
  %360 = vmatpush1.msra.mxu0 0.0
  %361 = vmatprep.subr.mxu0 0.0
  %362 = vmatpush1.msra.mxu0 0.0
  %363 = vmatprep.subr.mxu0 0.0
  %364 = vmatpush1.msra.mxu0 0.0
  %365 = vmatprep.subr.mxu0 0.0
  %366 = vmatpush1.msra.mxu0 0.0
  %367 = vmatprep.subr.mxu0 0.0
  %368 = vmatpush1.msra.mxu0 0.0
  %369 = vmatprep.subr.mxu0 0.0
  %370 = vmatpush1.msra.mxu0 0.0
  %371 = vmatprep.subr.mxu0 0.0
  %372 = vmatpush1.msra.mxu0 0.0
  %373 = vmatprep.subr.mxu0 0.0
  %374 = vmatpush1.msra.mxu0 0.0
  %375 = vmatprep.subr.mxu0 0.0
  %376 = vmatpush1.msra.mxu0 0.0
  %377 = vmatprep.subr.mxu0 0.0
  %378 = vmatpush1.msra.mxu0 0.0
  %379 = vmatprep.mubr.f32.mxu0 0.0
  %v380 = vand.u32 %v31, 4294901760
  %381 = vmatmul.mubr.f32.gmra.mrb[0].mxu0 %v380
  %v382 = vpop.f32.mrb[0].mxu0
  %v383 = vadd.f32 %v152, %v382
  %v384 = vpop.f32.mrb[0].mxu0
  %385 = vmatprep.mubr.f32.mxu0 0.0
  %v386 = vand.u32 %v34, 4294901760
  %387 = vmatmul.mubr.f32.gmra.mrb[0].mxu0 %v386
  %v388 = vpop.f32.mrb[0].mxu0
  %v389 = vadd.f32 %v162, %v388
  %v390 = vpop.f32.mrb[0].mxu0
  %391 = vmatprep.mubr.f32.mxu0 0.0
  %v392 = vand.u32 %v37, 4294901760
  %393 = vmatmul.mubr.f32.gmra.mrb[0].mxu0 %v392
  %v394 = vpop.f32.mrb[0].mxu0
  %v395 = vadd.f32 %v172, %v394
  %v396 = vpop.f32.mrb[0].mxu0
  %397 = vmatprep.mubr.f32.mxu0 0.0
  %v398 = vand.u32 %v40, 4294901760
  %399 = vmatmul.mubr.f32.gmra.mrb[0].mxu0 %v398
  %v400 = vpop.f32.mrb[0].mxu0
  %v401 = vadd.f32 %v182, %v400
  %v402 = vpop.f32.mrb[0].mxu0
  %403 = vmatprep.mubr.f32.mxu0 0.0
  %v404 = vand.u32 %v43, 4294901760
  %405 = vmatmul.mubr.f32.gmra.mrb[0].mxu0 %v404
  %v406 = vpop.f32.mrb[0].mxu0
  %v407 = vadd.f32 %v192, %v406
  %v408 = vpop.f32.mrb[0].mxu0
  %409 = vmatprep.mubr.f32.mxu0 0.0
  %v410 = vand.u32 %v46, 4294901760
  %411 = vmatmul.mubr.f32.gmra.mrb[0].mxu0 %v410
  %v412 = vpop.f32.mrb[0].mxu0
  %v413 = vadd.f32 %v202, %v412
  %v414 = vpop.f32.mrb[0].mxu0
  %415 = vmatprep.mubr.f32.mxu0 0.0
  %v416 = vand.u32 %v49, 4294901760
  %417 = vmatmul.mubr.f32.gmra.mrb[0].mxu0 %v416
  %v418 = vpop.f32.mrb[0].mxu0
  %v419 = vadd.f32 %v212, %v418
  %v420 = vpop.f32.mrb[0].mxu0
  %421 = vmatprep.mubr.f32.mxu0 0.0
  %v422 = vand.u32 %v52, 4294901760
  %423 = vmatmul.mubr.f32.gmra.mrb[0].mxu0 %v422
  %v424 = vpop.f32.mrb[0].mxu0
  %v425 = vadd.f32 %v222, %v424
  %v426 = vpop.f32.mrb[0].mxu0
  %427 = vmatprep.mubr.f32.mxu0 0.0
  %v428 = vand.u32 %v55, 4294901760
  %429 = vmatmul.mubr.f32.gmra.mrb[0].mxu0 %v428
  %v430 = vpop.f32.mrb[0].mxu0
  %v431 = vadd.f32 %v232, %v430
  %v432 = vpop.f32.mrb[0].mxu0
  %433 = vmatprep.mubr.f32.mxu0 0.0
  %v434 = vand.u32 %v58, 4294901760
  %435 = vmatmul.mubr.f32.gmra.mrb[0].mxu0 %v434
  %v436 = vpop.f32.mrb[0].mxu0
  %v437 = vadd.f32 %v242, %v436
  %v438 = vpop.f32.mrb[0].mxu0
  %439 = vmatprep.mubr.f32.mxu0 0.0
  %v440 = vand.u32 %v61, 4294901760
  %441 = vmatmul.mubr.f32.gmra.mrb[0].mxu0 %v440
  %v442 = vpop.f32.mrb[0].mxu0
  %v443 = vadd.f32 %v252, %v442
  %v444 = vpop.f32.mrb[0].mxu0
  %445 = vmatprep.mubr.f32.mxu0 0.0
  %v446 = vand.u32 %v64, 4294901760
  %447 = vmatmul.mubr.f32.gmra.mrb[0].mxu0 %v446
  %v448 = vpop.f32.mrb[0].mxu0
  %v449 = vadd.f32 %v262, %v448
  %v450 = vpop.f32.mrb[0].mxu0
  %451 = vmatprep.mubr.f32.mxu0 0.0
  %v452 = vand.u32 %v67, 4294901760
  %453 = vmatmul.mubr.f32.gmra.mrb[0].mxu0 %v452
  %v454 = vpop.f32.mrb[0].mxu0
  %v455 = vadd.f32 %v272, %v454
  %v456 = vpop.f32.mrb[0].mxu0
  %457 = vmatprep.mubr.f32.mxu0 0.0
  %v458 = vand.u32 %v70, 4294901760
  %459 = vmatmul.mubr.f32.gmra.mrb[0].mxu0 %v458
  %v460 = vpop.f32.mrb[0].mxu0
  %v461 = vadd.f32 %v282, %v460
  %v462 = vpop.f32.mrb[0].mxu0
  %463 = vmatprep.mubr.f32.mxu0 0.0
  %v464 = vand.u32 %v73, 4294901760
  %465 = vmatmul.mubr.f32.gmra.mrb[0].mxu0 %v464
  %v466 = vpop.f32.mrb[0].mxu0
  %v467 = vadd.f32 %v292, %v466
  %v468 = vpop.f32.mrb[0].mxu0
  %469 = vmatprep.mubr.f32.mxu0 0.0
  %v470 = vand.u32 %v76, 4294901760
  %471 = vmatmul.mubr.f32.gmra.mrb[0].mxu0 %v470
  %v472 = vpop.f32.mrb[0].mxu0
  %v473 = vadd.f32 %v302, %v472
  %v474 = vpop.f32.mrb[0].mxu0
  %475 = vdwg.mxu0
  %476 = vmatprep.subr.mxu0 0.0
  %v477 = vand.u32 %v27, 4294901760
  %v478 = vsub.f32 %v27, %v477
  %479 = vmatpush1.msra.mxu0 %v478
  %480 = vmatprep.subr.mxu0 0.0
  %v481 = vand.u32 %v28, 4294901760
  %v482 = vsub.f32 %v28, %v481
  %483 = vmatpush1.msra.mxu0 %v482
  %484 = vmatprep.subr.mxu0 0.0
  %485 = vmatpush1.msra.mxu0 0.0
  %486 = vmatprep.subr.mxu0 0.0
  %487 = vmatpush1.msra.mxu0 0.0
  %488 = vmatprep.subr.mxu0 0.0
  %489 = vmatpush1.msra.mxu0 0.0
  %490 = vmatprep.subr.mxu0 0.0
  %491 = vmatpush1.msra.mxu0 0.0
  %492 = vmatprep.subr.mxu0 0.0
  %493 = vmatpush1.msra.mxu0 0.0
  %494 = vmatprep.subr.mxu0 0.0
  %495 = vmatpush1.msra.mxu0 0.0
  %496 = vmatprep.subr.mxu0 0.0
  %497 = vmatpush1.msra.mxu0 0.0
  %498 = vmatprep.subr.mxu0 0.0
  %499 = vmatpush1.msra.mxu0 0.0
  %500 = vmatprep.subr.mxu0 0.0
  %501 = vmatpush1.msra.mxu0 0.0
  %502 = vmatprep.subr.mxu0 0.0
  %503 = vmatpush1.msra.mxu0 0.0
  %504 = vmatprep.subr.mxu0 0.0
  %505 = vmatpush1.msra.mxu0 0.0
  %506 = vmatprep.subr.mxu0 0.0
  %507 = vmatpush1.msra.mxu0 0.0
  %508 = vmatprep.subr.mxu0 0.0
  %509 = vmatpush1.msra.mxu0 0.0
  %510 = vmatprep.subr.mxu0 0.0
  %511 = vmatpush1.msra.mxu0 0.0
  %512 = vmatprep.subr.mxu0 0.0
  %513 = vmatpush1.msra.mxu0 0.0
  %514 = vmatprep.subr.mxu0 0.0
  %515 = vmatpush1.msra.mxu0 0.0
  %516 = vmatprep.subr.mxu0 0.0
  %517 = vmatpush1.msra.mxu0 0.0
  %518 = vmatprep.subr.mxu0 0.0
  %519 = vmatpush1.msra.mxu0 0.0
  %520 = vmatprep.subr.mxu0 0.0
  %521 = vmatpush1.msra.mxu0 0.0
  %522 = vmatprep.subr.mxu0 0.0
  %523 = vmatpush1.msra.mxu0 0.0
  %524 = vmatprep.subr.mxu0 0.0
  %525 = vmatpush1.msra.mxu0 0.0
  %526 = vmatprep.subr.mxu0 0.0
  %527 = vmatpush1.msra.mxu0 0.0
  %528 = vmatprep.subr.mxu0 0.0
  %529 = vmatpush1.msra.mxu0 0.0
  %530 = vmatprep.subr.mxu0 0.0
  %531 = vmatpush1.msra.mxu0 0.0
  %532 = vmatprep.subr.mxu0 0.0
  %533 = vmatpush1.msra.mxu0 0.0
  %534 = vmatprep.subr.mxu0 0.0
  %535 = vmatpush1.msra.mxu0 0.0
  %536 = vmatprep.subr.mxu0 0.0
  %537 = vmatpush1.msra.mxu0 0.0
  %538 = vmatprep.subr.mxu0 0.0
  %539 = vmatpush1.msra.mxu0 0.0
  %540 = vmatprep.subr.mxu0 0.0
  %541 = vmatpush1.msra.mxu0 0.0
  %542 = vmatprep.subr.mxu0 0.0
  %543 = vmatpush1.msra.mxu0 0.0
  %544 = vmatprep.mubr.f32.mxu0 0.0
  %v545 = vand.u32 %v31, 4294901760
  %v546 = vsub.f32 %v31, %v545
  %547 = vmatmul.mubr.f32.gmra.mrb[0].mxu0 %v546
  %v548 = vpop.f32.mrb[0].mxu0
  %v549 = vadd.f32 %v383, %v548
  %v550 = vpop.f32.mrb[0].mxu0
  %551 = vmatprep.mubr.f32.mxu0 0.0
  %v552 = vand.u32 %v34, 4294901760
  %v553 = vsub.f32 %v34, %v552
  %554 = vmatmul.mubr.f32.gmra.mrb[0].mxu0 %v553
  %v555 = vpop.f32.mrb[0].mxu0
  %v556 = vadd.f32 %v389, %v555
  %v557 = vpop.f32.mrb[0].mxu0
  %558 = vmatprep.mubr.f32.mxu0 0.0
  %v559 = vand.u32 %v37, 4294901760
  %v560 = vsub.f32 %v37, %v559
  %561 = vmatmul.mubr.f32.gmra.mrb[0].mxu0 %v560
  %v562 = vpop.f32.mrb[0].mxu0
  %v563 = vadd.f32 %v395, %v562
  %v564 = vpop.f32.mrb[0].mxu0
  %565 = vmatprep.mubr.f32.mxu0 0.0
  %v566 = vand.u32 %v40, 4294901760
  %v567 = vsub.f32 %v40, %v566
  %568 = vmatmul.mubr.f32.gmra.mrb[0].mxu0 %v567
  %v569 = vpop.f32.mrb[0].mxu0
  %v570 = vadd.f32 %v401, %v569
  %v571 = vpop.f32.mrb[0].mxu0
  %572 = vmatprep.mubr.f32.mxu0 0.0
  %v573 = vand.u32 %v43, 4294901760
  %v574 = vsub.f32 %v43, %v573
  %575 = vmatmul.mubr.f32.gmra.mrb[0].mxu0 %v574
  %v576 = vpop.f32.mrb[0].mxu0
  %v577 = vadd.f32 %v407, %v576
  %v578 = vpop.f32.mrb[0].mxu0
  %579 = vmatprep.mubr.f32.mxu0 0.0
  %v580 = vand.u32 %v46, 4294901760
  %v581 = vsub.f32 %v46, %v580
  %582 = vmatmul.mubr.f32.gmra.mrb[0].mxu0 %v581
  %v583 = vpop.f32.mrb[0].mxu0
  %v584 = vadd.f32 %v413, %v583
  %v585 = vpop.f32.mrb[0].mxu0
  %586 = vmatprep.mubr.f32.mxu0 0.0
  %v587 = vand.u32 %v49, 4294901760
  %v588 = vsub.f32 %v49, %v587
  %589 = vmatmul.mubr.f32.gmra.mrb[0].mxu0 %v588
  %v590 = vpop.f32.mrb[0].mxu0
  %v591 = vadd.f32 %v419, %v590
  %v592 = vpop.f32.mrb[0].mxu0
  %593 = vmatprep.mubr.f32.mxu0 0.0
  %v594 = vand.u32 %v52, 4294901760
  %v595 = vsub.f32 %v52, %v594
  %596 = vmatmul.mubr.f32.gmra.mrb[0].mxu0 %v595
  %v597 = vpop.f32.mrb[0].mxu0
  %v598 = vadd.f32 %v425, %v597
  %v599 = vpop.f32.mrb[0].mxu0
  %600 = vmatprep.mubr.f32.mxu0 0.0
  %v601 = vand.u32 %v55, 4294901760
  %v602 = vsub.f32 %v55, %v601
  %603 = vmatmul.mubr.f32.gmra.mrb[0].mxu0 %v602
  %v604 = vpop.f32.mrb[0].mxu0
  %v605 = vadd.f32 %v431, %v604
  %v606 = vpop.f32.mrb[0].mxu0
  %607 = vmatprep.mubr.f32.mxu0 0.0
  %v608 = vand.u32 %v58, 4294901760
  %v609 = vsub.f32 %v58, %v608
  %610 = vmatmul.mubr.f32.gmra.mrb[0].mxu0 %v609
  %v611 = vpop.f32.mrb[0].mxu0
  %v612 = vadd.f32 %v437, %v611
  %v613 = vpop.f32.mrb[0].mxu0
  %614 = vmatprep.mubr.f32.mxu0 0.0
  %v615 = vand.u32 %v61, 4294901760
  %v616 = vsub.f32 %v61, %v615
  %617 = vmatmul.mubr.f32.gmra.mrb[0].mxu0 %v616
  %v618 = vpop.f32.mrb[0].mxu0
  %v619 = vadd.f32 %v443, %v618
  %v620 = vpop.f32.mrb[0].mxu0
  %621 = vmatprep.mubr.f32.mxu0 0.0
  %v622 = vand.u32 %v64, 4294901760
  %v623 = vsub.f32 %v64, %v622
  %624 = vmatmul.mubr.f32.gmra.mrb[0].mxu0 %v623
  %v625 = vpop.f32.mrb[0].mxu0
  %v626 = vadd.f32 %v449, %v625
  %v627 = vpop.f32.mrb[0].mxu0
  %628 = vmatprep.mubr.f32.mxu0 0.0
  %v629 = vand.u32 %v67, 4294901760
  %v630 = vsub.f32 %v67, %v629
  %631 = vmatmul.mubr.f32.gmra.mrb[0].mxu0 %v630
  %v632 = vpop.f32.mrb[0].mxu0
  %v633 = vadd.f32 %v455, %v632
  %v634 = vpop.f32.mrb[0].mxu0
  %635 = vmatprep.mubr.f32.mxu0 0.0
  %v636 = vand.u32 %v70, 4294901760
  %v637 = vsub.f32 %v70, %v636
  %638 = vmatmul.mubr.f32.gmra.mrb[0].mxu0 %v637
  %v639 = vpop.f32.mrb[0].mxu0
  %v640 = vadd.f32 %v461, %v639
  %v641 = vpop.f32.mrb[0].mxu0
  %642 = vmatprep.mubr.f32.mxu0 0.0
  %v643 = vand.u32 %v73, 4294901760
  %v644 = vsub.f32 %v73, %v643
  %645 = vmatmul.mubr.f32.gmra.mrb[0].mxu0 %v644
  %v646 = vpop.f32.mrb[0].mxu0
  %v647 = vadd.f32 %v467, %v646
  %v648 = vpop.f32.mrb[0].mxu0
  %649 = vmatprep.mubr.f32.mxu0 0.0
  %v650 = vand.u32 %v76, 4294901760
  %v651 = vsub.f32 %v76, %v650
  %652 = vmatmul.mubr.f32.gmra.mrb[0].mxu0 %v651
  %v653 = vpop.f32.mrb[0].mxu0
  %v654 = vadd.f32 %v473, %v653
  %v655 = vpop.f32.mrb[0].mxu0
  %656 = vdwg.mxu0
  %657 = vmatprep.subr.mxu0 0.0
  %v658 = vand.u32 %v27, 4294901760
  %659 = vmatpush1.msra.mxu0 %v658
  %660 = vmatprep.subr.mxu0 0.0
  %v661 = vand.u32 %v28, 4294901760
  %662 = vmatpush1.msra.mxu0 %v661
  %663 = vmatprep.subr.mxu0 0.0
  %664 = vmatpush1.msra.mxu0 0.0
  %665 = vmatprep.subr.mxu0 0.0
  %666 = vmatpush1.msra.mxu0 0.0
  %667 = vmatprep.subr.mxu0 0.0
  %668 = vmatpush1.msra.mxu0 0.0
  %669 = vmatprep.subr.mxu0 0.0
  %670 = vmatpush1.msra.mxu0 0.0
  %671 = vmatprep.subr.mxu0 0.0
  %672 = vmatpush1.msra.mxu0 0.0
  %673 = vmatprep.subr.mxu0 0.0
  %674 = vmatpush1.msra.mxu0 0.0
  %675 = vmatprep.subr.mxu0 0.0
  %676 = vmatpush1.msra.mxu0 0.0
  %677 = vmatprep.subr.mxu0 0.0
  %678 = vmatpush1.msra.mxu0 0.0
  %679 = vmatprep.subr.mxu0 0.0
  %680 = vmatpush1.msra.mxu0 0.0
  %681 = vmatprep.subr.mxu0 0.0
  %682 = vmatpush1.msra.mxu0 0.0
  %683 = vmatprep.subr.mxu0 0.0
  %684 = vmatpush1.msra.mxu0 0.0
  %685 = vmatprep.subr.mxu0 0.0
  %686 = vmatpush1.msra.mxu0 0.0
  %687 = vmatprep.subr.mxu0 0.0
  %688 = vmatpush1.msra.mxu0 0.0
  %689 = vmatprep.subr.mxu0 0.0
  %690 = vmatpush1.msra.mxu0 0.0
  %691 = vmatprep.subr.mxu0 0.0
  %692 = vmatpush1.msra.mxu0 0.0
  %693 = vmatprep.subr.mxu0 0.0
  %694 = vmatpush1.msra.mxu0 0.0
  %695 = vmatprep.subr.mxu0 0.0
  %696 = vmatpush1.msra.mxu0 0.0
  %697 = vmatprep.subr.mxu0 0.0
  %698 = vmatpush1.msra.mxu0 0.0
  %699 = vmatprep.subr.mxu0 0.0
  %700 = vmatpush1.msra.mxu0 0.0
  %701 = vmatprep.subr.mxu0 0.0
  %702 = vmatpush1.msra.mxu0 0.0
  %703 = vmatprep.subr.mxu0 0.0
  %704 = vmatpush1.msra.mxu0 0.0
  %705 = vmatprep.subr.mxu0 0.0
  %706 = vmatpush1.msra.mxu0 0.0
  %707 = vmatprep.subr.mxu0 0.0
  %708 = vmatpush1.msra.mxu0 0.0
  %709 = vmatprep.subr.mxu0 0.0
  %710 = vmatpush1.msra.mxu0 0.0
  %711 = vmatprep.subr.mxu0 0.0
  %712 = vmatpush1.msra.mxu0 0.0
  %713 = vmatprep.subr.mxu0 0.0
  %714 = vmatpush1.msra.mxu0 0.0
  %715 = vmatprep.subr.mxu0 0.0
  %716 = vmatpush1.msra.mxu0 0.0
  %717 = vmatprep.subr.mxu0 0.0
  %718 = vmatpush1.msra.mxu0 0.0
  %719 = vmatprep.subr.mxu0 0.0
  %720 = vmatpush1.msra.mxu0 0.0
  %721 = vmatprep.subr.mxu0 0.0
  %722 = vmatpush1.msra.mxu0 0.0
  %723 = vmatprep.mubr.f32.mxu0 0.0
  %v724 = vand.u32 %v31, 4294901760
  %v725 = vsub.f32 %v31, %v724
  %v726 = vand.u32 %v725, 4294901760
  %727 = vmatmul.mubr.f32.gmra.mrb[0].mxu0 %v726
  %v728 = vpop.f32.mrb[0].mxu0
  %v729 = vadd.f32 %v549, %v728
  %v730 = vpop.f32.mrb[0].mxu0
  %731 = vmatprep.mubr.f32.mxu0 0.0
  %v732 = vand.u32 %v34, 4294901760
  %v733 = vsub.f32 %v34, %v732
  %v734 = vand.u32 %v733, 4294901760
  %735 = vmatmul.mubr.f32.gmra.mrb[0].mxu0 %v734
  %v736 = vpop.f32.mrb[0].mxu0
  %v737 = vadd.f32 %v556, %v736
  %v738 = vpop.f32.mrb[0].mxu0
  %739 = vmatprep.mubr.f32.mxu0 0.0
  %v740 = vand.u32 %v37, 4294901760
  %v741 = vsub.f32 %v37, %v740
  %v742 = vand.u32 %v741, 4294901760
  %743 = vmatmul.mubr.f32.gmra.mrb[0].mxu0 %v742
  %v744 = vpop.f32.mrb[0].mxu0
  %v745 = vadd.f32 %v563, %v744
  %v746 = vpop.f32.mrb[0].mxu0
  %747 = vmatprep.mubr.f32.mxu0 0.0
  %v748 = vand.u32 %v40, 4294901760
  %v749 = vsub.f32 %v40, %v748
  %v750 = vand.u32 %v749, 4294901760
  %751 = vmatmul.mubr.f32.gmra.mrb[0].mxu0 %v750
  %v752 = vpop.f32.mrb[0].mxu0
  %v753 = vadd.f32 %v570, %v752
  %v754 = vpop.f32.mrb[0].mxu0
  %755 = vmatprep.mubr.f32.mxu0 0.0
  %v756 = vand.u32 %v43, 4294901760
  %v757 = vsub.f32 %v43, %v756
  %v758 = vand.u32 %v757, 4294901760
  %759 = vmatmul.mubr.f32.gmra.mrb[0].mxu0 %v758
  %v760 = vpop.f32.mrb[0].mxu0
  %v761 = vadd.f32 %v577, %v760
  %v762 = vpop.f32.mrb[0].mxu0
  %763 = vmatprep.mubr.f32.mxu0 0.0
  %v764 = vand.u32 %v46, 4294901760
  %v765 = vsub.f32 %v46, %v764
  %v766 = vand.u32 %v765, 4294901760
  %767 = vmatmul.mubr.f32.gmra.mrb[0].mxu0 %v766
  %v768 = vpop.f32.mrb[0].mxu0
  %v769 = vadd.f32 %v584, %v768
  %v770 = vpop.f32.mrb[0].mxu0
  %771 = vmatprep.mubr.f32.mxu0 0.0
  %v772 = vand.u32 %v49, 4294901760
  %v773 = vsub.f32 %v49, %v772
  %v774 = vand.u32 %v773, 4294901760
  %775 = vmatmul.mubr.f32.gmra.mrb[0].mxu0 %v774
  %v776 = vpop.f32.mrb[0].mxu0
  %v777 = vadd.f32 %v591, %v776
  %v778 = vpop.f32.mrb[0].mxu0
  %779 = vmatprep.mubr.f32.mxu0 0.0
  %v780 = vand.u32 %v52, 4294901760
  %v781 = vsub.f32 %v52, %v780
  %v782 = vand.u32 %v781, 4294901760
  %783 = vmatmul.mubr.f32.gmra.mrb[0].mxu0 %v782
  %v784 = vpop.f32.mrb[0].mxu0
  %v785 = vadd.f32 %v598, %v784
  %v786 = vpop.f32.mrb[0].mxu0
  %787 = vmatprep.mubr.f32.mxu0 0.0
  %v788 = vand.u32 %v55, 4294901760
  %v789 = vsub.f32 %v55, %v788
  %v790 = vand.u32 %v789, 4294901760
  %791 = vmatmul.mubr.f32.gmra.mrb[0].mxu0 %v790
  %v792 = vpop.f32.mrb[0].mxu0
  %v793 = vadd.f32 %v605, %v792
  %v794 = vpop.f32.mrb[0].mxu0
  %795 = vmatprep.mubr.f32.mxu0 0.0
  %v796 = vand.u32 %v58, 4294901760
  %v797 = vsub.f32 %v58, %v796
  %v798 = vand.u32 %v797, 4294901760
  %799 = vmatmul.mubr.f32.gmra.mrb[0].mxu0 %v798
  %v800 = vpop.f32.mrb[0].mxu0
  %v801 = vadd.f32 %v612, %v800
  %v802 = vpop.f32.mrb[0].mxu0
  %803 = vmatprep.mubr.f32.mxu0 0.0
  %v804 = vand.u32 %v61, 4294901760
  %v805 = vsub.f32 %v61, %v804
  %v806 = vand.u32 %v805, 4294901760
  %807 = vmatmul.mubr.f32.gmra.mrb[0].mxu0 %v806
  %v808 = vpop.f32.mrb[0].mxu0
  %v809 = vadd.f32 %v619, %v808
  %v810 = vpop.f32.mrb[0].mxu0
  %811 = vmatprep.mubr.f32.mxu0 0.0
  %v812 = vand.u32 %v64, 4294901760
  %v813 = vsub.f32 %v64, %v812
  %v814 = vand.u32 %v813, 4294901760
  %815 = vmatmul.mubr.f32.gmra.mrb[0].mxu0 %v814
  %v816 = vpop.f32.mrb[0].mxu0
  %v817 = vadd.f32 %v626, %v816
  %v818 = vpop.f32.mrb[0].mxu0
  %819 = vmatprep.mubr.f32.mxu0 0.0
  %v820 = vand.u32 %v67, 4294901760
  %v821 = vsub.f32 %v67, %v820
  %v822 = vand.u32 %v821, 4294901760
  %823 = vmatmul.mubr.f32.gmra.mrb[0].mxu0 %v822
  %v824 = vpop.f32.mrb[0].mxu0
  %v825 = vadd.f32 %v633, %v824
  %v826 = vpop.f32.mrb[0].mxu0
  %827 = vmatprep.mubr.f32.mxu0 0.0
  %v828 = vand.u32 %v70, 4294901760
  %v829 = vsub.f32 %v70, %v828
  %v830 = vand.u32 %v829, 4294901760
  %831 = vmatmul.mubr.f32.gmra.mrb[0].mxu0 %v830
  %v832 = vpop.f32.mrb[0].mxu0
  %v833 = vadd.f32 %v640, %v832
  %v834 = vpop.f32.mrb[0].mxu0
  %835 = vmatprep.mubr.f32.mxu0 0.0
  %v836 = vand.u32 %v73, 4294901760
  %v837 = vsub.f32 %v73, %v836
  %v838 = vand.u32 %v837, 4294901760
  %839 = vmatmul.mubr.f32.gmra.mrb[0].mxu0 %v838
  %v840 = vpop.f32.mrb[0].mxu0
  %v841 = vadd.f32 %v647, %v840
  %v842 = vpop.f32.mrb[0].mxu0
  %843 = vmatprep.mubr.f32.mxu0 0.0
  %v844 = vand.u32 %v76, 4294901760
  %v845 = vsub.f32 %v76, %v844
  %v846 = vand.u32 %v845, 4294901760
  %847 = vmatmul.mubr.f32.gmra.mrb[0].mxu0 %v846
  %v848 = vpop.f32.mrb[0].mxu0
  %v849 = vadd.f32 %v654, %v848
  %v850 = vpop.f32.mrb[0].mxu0
  %851 = vdwg.mxu0
  %852 = vmatprep.subr.mxu0 0.0
  %v853 = vand.u32 %v27, 4294901760
  %v854 = vsub.f32 %v27, %v853
  %v855 = vand.u32 %v854, 4294901760
  %856 = vmatpush1.msra.mxu0 %v855
  %857 = vmatprep.subr.mxu0 0.0
  %v858 = vand.u32 %v28, 4294901760
  %v859 = vsub.f32 %v28, %v858
  %v860 = vand.u32 %v859, 4294901760
  %861 = vmatpush1.msra.mxu0 %v860
  %862 = vmatprep.subr.mxu0 0.0
  %863 = vmatpush1.msra.mxu0 0.0
  %864 = vmatprep.subr.mxu0 0.0
  %865 = vmatpush1.msra.mxu0 0.0
  %866 = vmatprep.subr.mxu0 0.0
  %867 = vmatpush1.msra.mxu0 0.0
  %868 = vmatprep.subr.mxu0 0.0
  %869 = vmatpush1.msra.mxu0 0.0
  %870 = vmatprep.subr.mxu0 0.0
  %871 = vmatpush1.msra.mxu0 0.0
  %872 = vmatprep.subr.mxu0 0.0
  %873 = vmatpush1.msra.mxu0 0.0
  %874 = vmatprep.subr.mxu0 0.0
  %875 = vmatpush1.msra.mxu0 0.0
  %876 = vmatprep.subr.mxu0 0.0
  %877 = vmatpush1.msra.mxu0 0.0
  %878 = vmatprep.subr.mxu0 0.0
  %879 = vmatpush1.msra.mxu0 0.0
  %880 = vmatprep.subr.mxu0 0.0
  %881 = vmatpush1.msra.mxu0 0.0
  %882 = vmatprep.subr.mxu0 0.0
  %883 = vmatpush1.msra.mxu0 0.0
  %884 = vmatprep.subr.mxu0 0.0
  %885 = vmatpush1.msra.mxu0 0.0
  %886 = vmatprep.subr.mxu0 0.0
  %887 = vmatpush1.msra.mxu0 0.0
  %888 = vmatprep.subr.mxu0 0.0
  %889 = vmatpush1.msra.mxu0 0.0
  %890 = vmatprep.subr.mxu0 0.0
  %891 = vmatpush1.msra.mxu0 0.0
  %892 = vmatprep.subr.mxu0 0.0
  %893 = vmatpush1.msra.mxu0 0.0
  %894 = vmatprep.subr.mxu0 0.0
  %895 = vmatpush1.msra.mxu0 0.0
  %896 = vmatprep.subr.mxu0 0.0
  %897 = vmatpush1.msra.mxu0 0.0
  %898 = vmatprep.subr.mxu0 0.0
  %899 = vmatpush1.msra.mxu0 0.0
  %900 = vmatprep.subr.mxu0 0.0
  %901 = vmatpush1.msra.mxu0 0.0
  %902 = vmatprep.subr.mxu0 0.0
  %903 = vmatpush1.msra.mxu0 0.0
  %904 = vmatprep.subr.mxu0 0.0
  %905 = vmatpush1.msra.mxu0 0.0
  %906 = vmatprep.subr.mxu0 0.0
  %907 = vmatpush1.msra.mxu0 0.0
  %908 = vmatprep.subr.mxu0 0.0
  %909 = vmatpush1.msra.mxu0 0.0
  %910 = vmatprep.subr.mxu0 0.0
  %911 = vmatpush1.msra.mxu0 0.0
  %912 = vmatprep.subr.mxu0 0.0
  %913 = vmatpush1.msra.mxu0 0.0
  %914 = vmatprep.subr.mxu0 0.0
  %915 = vmatpush1.msra.mxu0 0.0
  %916 = vmatprep.subr.mxu0 0.0
  %917 = vmatpush1.msra.mxu0 0.0
  %918 = vmatprep.subr.mxu0 0.0
  %919 = vmatpush1.msra.mxu0 0.0
  %920 = vmatprep.subr.mxu0 0.0
  %921 = vmatpush1.msra.mxu0 0.0
  %922 = vmatprep.mubr.f32.mxu0 0.0
  %v923 = vand.u32 %v31, 4294901760
  %924 = vmatmul.mubr.f32.gmra.mrb[0].mxu0 %v923
  %v925 = vpop.f32.mrb[0].mxu0
  %v926 = vadd.f32 %v729, %v925
  %v927 = vpop.f32.mrb[0].mxu0
  %928 = vmatprep.mubr.f32.mxu0 0.0
  %v929 = vand.u32 %v34, 4294901760
  %930 = vmatmul.mubr.f32.gmra.mrb[0].mxu0 %v929
  %v931 = vpop.f32.mrb[0].mxu0
  %v932 = vadd.f32 %v737, %v931
  %v933 = vpop.f32.mrb[0].mxu0
  %934 = vmatprep.mubr.f32.mxu0 0.0
  %v935 = vand.u32 %v37, 4294901760
  %936 = vmatmul.mubr.f32.gmra.mrb[0].mxu0 %v935
  %v937 = vpop.f32.mrb[0].mxu0
  %v938 = vadd.f32 %v745, %v937
  %v939 = vpop.f32.mrb[0].mxu0
  %940 = vmatprep.mubr.f32.mxu0 0.0
  %v941 = vand.u32 %v40, 4294901760
  %942 = vmatmul.mubr.f32.gmra.mrb[0].mxu0 %v941
  %v943 = vpop.f32.mrb[0].mxu0
  %v944 = vadd.f32 %v753, %v943
  %v945 = vpop.f32.mrb[0].mxu0
  %946 = vmatprep.mubr.f32.mxu0 0.0
  %v947 = vand.u32 %v43, 4294901760
  %948 = vmatmul.mubr.f32.gmra.mrb[0].mxu0 %v947
  %v949 = vpop.f32.mrb[0].mxu0
  %v950 = vadd.f32 %v761, %v949
  %v951 = vpop.f32.mrb[0].mxu0
  %952 = vmatprep.mubr.f32.mxu0 0.0
  %v953 = vand.u32 %v46, 4294901760
  %954 = vmatmul.mubr.f32.gmra.mrb[0].mxu0 %v953
  %v955 = vpop.f32.mrb[0].mxu0
  %v956 = vadd.f32 %v769, %v955
  %v957 = vpop.f32.mrb[0].mxu0
  %958 = vmatprep.mubr.f32.mxu0 0.0
  %v959 = vand.u32 %v49, 4294901760
  %960 = vmatmul.mubr.f32.gmra.mrb[0].mxu0 %v959
  %v961 = vpop.f32.mrb[0].mxu0
  %v962 = vadd.f32 %v777, %v961
  %v963 = vpop.f32.mrb[0].mxu0
  %964 = vmatprep.mubr.f32.mxu0 0.0
  %v965 = vand.u32 %v52, 4294901760
  %966 = vmatmul.mubr.f32.gmra.mrb[0].mxu0 %v965
  %v967 = vpop.f32.mrb[0].mxu0
  %v968 = vadd.f32 %v785, %v967
  %v969 = vpop.f32.mrb[0].mxu0
  %970 = vmatprep.mubr.f32.mxu0 0.0
  %v971 = vand.u32 %v55, 4294901760
  %972 = vmatmul.mubr.f32.gmra.mrb[0].mxu0 %v971
  %v973 = vpop.f32.mrb[0].mxu0
  %v974 = vadd.f32 %v793, %v973
  %v975 = vpop.f32.mrb[0].mxu0
  %976 = vmatprep.mubr.f32.mxu0 0.0
  %v977 = vand.u32 %v58, 4294901760
  %978 = vmatmul.mubr.f32.gmra.mrb[0].mxu0 %v977
  %v979 = vpop.f32.mrb[0].mxu0
  %v980 = vadd.f32 %v801, %v979
  %v981 = vpop.f32.mrb[0].mxu0
  %982 = vmatprep.mubr.f32.mxu0 0.0
  %v983 = vand.u32 %v61, 4294901760
  %984 = vmatmul.mubr.f32.gmra.mrb[0].mxu0 %v983
  %v985 = vpop.f32.mrb[0].mxu0
  %v986 = vadd.f32 %v809, %v985
  %v987 = vpop.f32.mrb[0].mxu0
  %988 = vmatprep.mubr.f32.mxu0 0.0
  %v989 = vand.u32 %v64, 4294901760
  %990 = vmatmul.mubr.f32.gmra.mrb[0].mxu0 %v989
  %v991 = vpop.f32.mrb[0].mxu0
  %v992 = vadd.f32 %v817, %v991
  %v993 = vpop.f32.mrb[0].mxu0
  %994 = vmatprep.mubr.f32.mxu0 0.0
  %v995 = vand.u32 %v67, 4294901760
  %996 = vmatmul.mubr.f32.gmra.mrb[0].mxu0 %v995
  %v997 = vpop.f32.mrb[0].mxu0
  %v998 = vadd.f32 %v825, %v997
  %v999 = vpop.f32.mrb[0].mxu0
  %1000 = vmatprep.mubr.f32.mxu0 0.0
  %v1001 = vand.u32 %v70, 4294901760
  %1002 = vmatmul.mubr.f32.gmra.mrb[0].mxu0 %v1001
  %v1003 = vpop.f32.mrb[0].mxu0
  %v1004 = vadd.f32 %v833, %v1003
  %v1005 = vpop.f32.mrb[0].mxu0
  %1006 = vmatprep.mubr.f32.mxu0 0.0
  %v1007 = vand.u32 %v73, 4294901760
  %1008 = vmatmul.mubr.f32.gmra.mrb[0].mxu0 %v1007
  %v1009 = vpop.f32.mrb[0].mxu0
  %v1010 = vadd.f32 %v841, %v1009
  %v1011 = vpop.f32.mrb[0].mxu0
  %1012 = vmatprep.mubr.f32.mxu0 0.0
  %v1013 = vand.u32 %v76, 4294901760
  %1014 = vmatmul.mubr.f32.gmra.mrb[0].mxu0 %v1013
  %v1015 = vpop.f32.mrb[0].mxu0
  %v1016 = vadd.f32 %v849, %v1015
  %v1017 = vpop.f32.mrb[0].mxu0
  %1018 = vdwg.mxu0
  %1019 = vmatprep.subr.mxu0 0.0
  %v1020 = vand.u32 %v27, 4294901760
  %1021 = vmatpush1.msra.mxu0 %v1020
  %1022 = vmatprep.subr.mxu0 0.0
  %v1023 = vand.u32 %v28, 4294901760
  %1024 = vmatpush1.msra.mxu0 %v1023
  %1025 = vmatprep.subr.mxu0 0.0
  %1026 = vmatpush1.msra.mxu0 0.0
  %1027 = vmatprep.subr.mxu0 0.0
  %1028 = vmatpush1.msra.mxu0 0.0
  %1029 = vmatprep.subr.mxu0 0.0
  %1030 = vmatpush1.msra.mxu0 0.0
  %1031 = vmatprep.subr.mxu0 0.0
  %1032 = vmatpush1.msra.mxu0 0.0
  %1033 = vmatprep.subr.mxu0 0.0
  %1034 = vmatpush1.msra.mxu0 0.0
  %1035 = vmatprep.subr.mxu0 0.0
  %1036 = vmatpush1.msra.mxu0 0.0
  %1037 = vmatprep.subr.mxu0 0.0
  %1038 = vmatpush1.msra.mxu0 0.0
  %1039 = vmatprep.subr.mxu0 0.0
  %1040 = vmatpush1.msra.mxu0 0.0
  %1041 = vmatprep.subr.mxu0 0.0
  %1042 = vmatpush1.msra.mxu0 0.0
  %1043 = vmatprep.subr.mxu0 0.0
  %1044 = vmatpush1.msra.mxu0 0.0
  %1045 = vmatprep.subr.mxu0 0.0
  %1046 = vmatpush1.msra.mxu0 0.0
  %1047 = vmatprep.subr.mxu0 0.0
  %1048 = vmatpush1.msra.mxu0 0.0
  %1049 = vmatprep.subr.mxu0 0.0
  %1050 = vmatpush1.msra.mxu0 0.0
  %1051 = vmatprep.subr.mxu0 0.0
  %1052 = vmatpush1.msra.mxu0 0.0
  %1053 = vmatprep.subr.mxu0 0.0
  %1054 = vmatpush1.msra.mxu0 0.0
  %1055 = vmatprep.subr.mxu0 0.0
  %1056 = vmatpush1.msra.mxu0 0.0
  %1057 = vmatprep.subr.mxu0 0.0
  %1058 = vmatpush1.msra.mxu0 0.0
  %1059 = vmatprep.subr.mxu0 0.0
  %1060 = vmatpush1.msra.mxu0 0.0
  %1061 = vmatprep.subr.mxu0 0.0
  %1062 = vmatpush1.msra.mxu0 0.0
  %1063 = vmatprep.subr.mxu0 0.0
  %1064 = vmatpush1.msra.mxu0 0.0
  %1065 = vmatprep.subr.mxu0 0.0
  %1066 = vmatpush1.msra.mxu0 0.0
  %1067 = vmatprep.subr.mxu0 0.0
  %1068 = vmatpush1.msra.mxu0 0.0
  %1069 = vmatprep.subr.mxu0 0.0
  %1070 = vmatpush1.msra.mxu0 0.0
  %1071 = vmatprep.subr.mxu0 0.0
  %1072 = vmatpush1.msra.mxu0 0.0
  %1073 = vmatprep.subr.mxu0 0.0
  %1074 = vmatpush1.msra.mxu0 0.0
  %1075 = vmatprep.subr.mxu0 0.0
  %1076 = vmatpush1.msra.mxu0 0.0
  %1077 = vmatprep.subr.mxu0 0.0
  %1078 = vmatpush1.msra.mxu0 0.0
  %1079 = vmatprep.subr.mxu0 0.0
  %1080 = vmatpush1.msra.mxu0 0.0
  %1081 = vmatprep.subr.mxu0 0.0
  %1082 = vmatpush1.msra.mxu0 0.0
  %1083 = vmatprep.subr.mxu0 0.0
  %1084 = vmatpush1.msra.mxu0 0.0
  %1085 = vmatprep.mubr.f32.mxu0 0.0
  %v1086 = vand.u32 %v31, 4294901760
  %1087 = vmatmul.mubr.f32.gmra.mrb[0].mxu0 %v1086
  %v1088 = vpop.f32.mrb[0].mxu0
  %v1089 = vadd.f32 %v926, %v1088
  %v1090 = vpop.f32.mrb[0].mxu0
  %1091 = vmatprep.mubr.f32.mxu0 0.0
  %v1092 = vand.u32 %v34, 4294901760
  %1093 = vmatmul.mubr.f32.gmra.mrb[0].mxu0 %v1092
  %v1094 = vpop.f32.mrb[0].mxu0
  %v1095 = vadd.f32 %v932, %v1094
  %v1096 = vpop.f32.mrb[0].mxu0
  %1097 = vmatprep.mubr.f32.mxu0 0.0
  %v1098 = vand.u32 %v37, 4294901760
  %1099 = vmatmul.mubr.f32.gmra.mrb[0].mxu0 %v1098
  %v1100 = vpop.f32.mrb[0].mxu0
  %v1101 = vadd.f32 %v938, %v1100
  %v1102 = vpop.f32.mrb[0].mxu0
  %1103 = vmatprep.mubr.f32.mxu0 0.0
  %v1104 = vand.u32 %v40, 4294901760
  %1105 = vmatmul.mubr.f32.gmra.mrb[0].mxu0 %v1104
  %v1106 = vpop.f32.mrb[0].mxu0
  %v1107 = vadd.f32 %v944, %v1106
  %v1108 = vpop.f32.mrb[0].mxu0
  %1109 = vmatprep.mubr.f32.mxu0 0.0
  %v1110 = vand.u32 %v43, 4294901760
  %1111 = vmatmul.mubr.f32.gmra.mrb[0].mxu0 %v1110
  %v1112 = vpop.f32.mrb[0].mxu0
  %v1113 = vadd.f32 %v950, %v1112
  %v1114 = vpop.f32.mrb[0].mxu0
  %1115 = vmatprep.mubr.f32.mxu0 0.0
  %v1116 = vand.u32 %v46, 4294901760
  %1117 = vmatmul.mubr.f32.gmra.mrb[0].mxu0 %v1116
  %v1118 = vpop.f32.mrb[0].mxu0
  %v1119 = vadd.f32 %v956, %v1118
  %v1120 = vpop.f32.mrb[0].mxu0
  %1121 = vmatprep.mubr.f32.mxu0 0.0
  %v1122 = vand.u32 %v49, 4294901760
  %1123 = vmatmul.mubr.f32.gmra.mrb[0].mxu0 %v1122
  %v1124 = vpop.f32.mrb[0].mxu0
  %v1125 = vadd.f32 %v962, %v1124
  %v1126 = vpop.f32.mrb[0].mxu0
  %1127 = vmatprep.mubr.f32.mxu0 0.0
  %v1128 = vand.u32 %v52, 4294901760
  %1129 = vmatmul.mubr.f32.gmra.mrb[0].mxu0 %v1128
  %v1130 = vpop.f32.mrb[0].mxu0
  %v1131 = vadd.f32 %v968, %v1130
  %v1132 = vpop.f32.mrb[0].mxu0
  %1133 = vmatprep.mubr.f32.mxu0 0.0
  %v1134 = vand.u32 %v55, 4294901760
  %1135 = vmatmul.mubr.f32.gmra.mrb[0].mxu0 %v1134
  %v1136 = vpop.f32.mrb[0].mxu0
  %v1137 = vadd.f32 %v974, %v1136
  %v1138 = vpop.f32.mrb[0].mxu0
  %1139 = vmatprep.mubr.f32.mxu0 0.0
  %v1140 = vand.u32 %v58, 4294901760
  %1141 = vmatmul.mubr.f32.gmra.mrb[0].mxu0 %v1140
  %v1142 = vpop.f32.mrb[0].mxu0
  %v1143 = vadd.f32 %v980, %v1142
  %v1144 = vpop.f32.mrb[0].mxu0
  %1145 = vmatprep.mubr.f32.mxu0 0.0
  %v1146 = vand.u32 %v61, 4294901760
  %1147 = vmatmul.mubr.f32.gmra.mrb[0].mxu0 %v1146
  %v1148 = vpop.f32.mrb[0].mxu0
  %v1149 = vadd.f32 %v986, %v1148
  %v1150 = vpop.f32.mrb[0].mxu0
  %1151 = vmatprep.mubr.f32.mxu0 0.0
  %v1152 = vand.u32 %v64, 4294901760
  %1153 = vmatmul.mubr.f32.gmra.mrb[0].mxu0 %v1152
  %v1154 = vpop.f32.mrb[0].mxu0
  %v1155 = vadd.f32 %v992, %v1154
  %v1156 = vpop.f32.mrb[0].mxu0
  %1157 = vmatprep.mubr.f32.mxu0 0.0
  %v1158 = vand.u32 %v67, 4294901760
  %1159 = vmatmul.mubr.f32.gmra.mrb[0].mxu0 %v1158
  %v1160 = vpop.f32.mrb[0].mxu0
  %v1161 = vadd.f32 %v998, %v1160
  %v1162 = vpop.f32.mrb[0].mxu0
  %1163 = vmatprep.mubr.f32.mxu0 0.0
  %v1164 = vand.u32 %v70, 4294901760
  %1165 = vmatmul.mubr.f32.gmra.mrb[0].mxu0 %v1164
  %v1166 = vpop.f32.mrb[0].mxu0
  %v1167 = vadd.f32 %v1004, %v1166
  %v1168 = vpop.f32.mrb[0].mxu0
  %1169 = vmatprep.mubr.f32.mxu0 0.0
  %v1170 = vand.u32 %v73, 4294901760
  %1171 = vmatmul.mubr.f32.gmra.mrb[0].mxu0 %v1170
  %v1172 = vpop.f32.mrb[0].mxu0
  %v1173 = vadd.f32 %v1010, %v1172
  %v1174 = vpop.f32.mrb[0].mxu0
  %1175 = vmatprep.mubr.f32.mxu0 0.0
  %v1176 = vand.u32 %v76, 4294901760
  %1177 = vmatmul.mubr.f32.gmra.mrb[0].mxu0 %v1176
  %v1178 = vpop.f32.mrb[0].mxu0
  %v1179 = vadd.f32 %v1016, %v1178
  %v1180 = vpop.f32.mrb[0].mxu0
  %1181 = vdwg.mxu0
  %vm1182 = vcmask 523264
  %1183 = vst.msk [vmem:[%s2] sm:$0xff] %vm1182, %v1089
  %1184 = vst.msk [vmem:[%s2 + $0x8] sm:$0xff] %vm1182, %v1095
  %1185 = vst.msk [vmem:[%s2 + $0x10] sm:$0xff] %vm1182, %v1101
  %1186 = vst.msk [vmem:[%s2 + $0x18] sm:$0xff] %vm1182, %v1107
  %1187 = vst.msk [vmem:[%s2 + $0x20] sm:$0xff] %vm1182, %v1113
  %1188 = vst.msk [vmem:[%s2 + $0x28] sm:$0xff] %vm1182, %v1119
  %1189 = vst.msk [vmem:[%s2 + $0x30] sm:$0xff] %vm1182, %v1125
  %1190 = vst.msk [vmem:[%s2 + $0x38] sm:$0xff] %vm1182, %v1131
  %1191 = vst.msk [vmem:[%s2 + $0x40] sm:$0xff] %vm1182, %v1137
  %1192 = vst.msk [vmem:[%s2 + $0x48] sm:$0xff] %vm1182, %v1143
  %1193 = vst.msk [vmem:[%s2 + $0x50] sm:$0xff] %vm1182, %v1149
  %1194 = vst.msk [vmem:[%s2 + $0x58] sm:$0xff] %vm1182, %v1155
  %1195 = vst.msk [vmem:[%s2 + $0x60] sm:$0xff] %vm1182, %v1161
  %1196 = vst.msk [vmem:[%s2 + $0x68] sm:$0xff] %vm1182, %v1167
  %1197 = vst.msk [vmem:[%s2 + $0x70] sm:$0xff] %vm1182, %v1173
  %1198 = vst.msk [vmem:[%s2 + $0x78] sm:$0xff] %vm1182, %v1179
  // Predicated region
  $region10: #{tpu_custom_call.1} parent=0 // pred_check
    _
  $region11: #{tpu_custom_call.1} parent=0 // pred_check_branch
    %1200 = sbr.rel (0) target = $region13
  $region12: #{tpu_custom_call.1} parent=0 // pred_region
    _
  $region13: #{tpu_custom_call.1} parent=0 // pred_fallthru
    _
  // Predicated region
  $region14: #{tpu_custom_call.1} parent=0 // pred_check
    _
  $region15: #{tpu_custom_call.1} parent=0 // pred_check_branch
    %1202 = sbr.rel (0) target = $region17
  $region16: #{tpu_custom_call.1} parent=0 // pred_region
    _
  $region17: #{tpu_custom_call.1} parent=0 // pred_fallthru
    _

</llo_original>
